<compile_context>
chip_gen: v7x
topology: tpu7x:2x2x1
jax: 0.10.0
libtpu: 0.0.40
codegen_flags: <defaults>
</compile_context>

<pallas_src>
import functools

import jax
import jax.numpy as jnp
from jax.experimental import pallas as pl
from jax.experimental.pallas import tpu as pltpu


def _round_up(x, m):
    return ((x + m - 1) // m) * m


def _downstream_kernel(h_ref, w_ref, out_ref, *, t, r):
    """Fused (bm,Kpad)@(Kpad,Npad) matmul + masked softmax epilogue, one lane-dense store.

    h_ref:   (bm, Kpad)  f32   -- hidden-state rows (K zero-padded)
    w_ref:   (Kpad, Npad) f32  -- [theta_classification | theta_rank | zero pad]
    out_ref: (bm, Npad)        -- lanes [0,t): predictions, [t,t+r): attention, rest: don't-care
    """
    fused = jnp.dot(h_ref[...], w_ref[...], preferred_element_type=jnp.float32)

    lane = jax.lax.broadcasted_iota(jnp.int32, fused.shape, dimension=1)
    is_rank = (lane >= t) & (lane < t + r)

    # Max-stabilized softmax restricted to the rank-logit lanes (whole-vreg f32 VPU ops;
    # f32 epilogue kept deliberately -- v5e has no bf16 VPU/EUP path).
    logits = jnp.where(is_rank, fused, -jnp.inf)
    m = jnp.max(logits, axis=-1, keepdims=True)
    e = jnp.exp(logits - m)                      # exp(-inf) = 0 on prediction / pad lanes
    denom = jnp.sum(e, axis=-1, keepdims=True)
    att = e / denom                              # exact divide: approx vrcp bought nothing here

    # Prediction lanes pass the raw logits through; rank lanes get the softmax.
    out_ref[...] = jnp.where(is_rank, att, fused).astype(out_ref.dtype)


def fuse_params(theta_classification, theta_rank):
    """Init-time prep: concat the two weights, pad K and N to 128 multiples, keep f32."""
    d, t = theta_classification.shape
    d2, r = theta_rank.shape
    assert d == d2, "weight row dims must match combined_dimensions"
    assert r >= 1, "softmax needs at least one rank lane"
    n = t + r
    n_pad = max(128, _round_up(n, 128))
    k_pad = max(128, _round_up(d, 128))
    w = jnp.concatenate([theta_classification, theta_rank], axis=1).astype(jnp.float32)
    w = jnp.pad(w, ((0, k_pad - d), (0, n_pad - n)))
    return w, d, t, r


def downstream_forward_batched(hidden_states, w_fused, d, t, r, *,
                               block_m=256, out_dtype=jnp.float32):
    """Batched forward: hidden_states (B, D) -> (predictions (B,t), attention (B,r))."""
    b, din = hidden_states.shape
    assert din == d, f"hidden_states rows must have {d} features"
    k_pad, n_pad = w_fused.shape

    h = hidden_states.astype(jnp.float32)
    h = jnp.pad(h, ((0, 0), (0, k_pad - d)))          # align K to 128 lanes

    bm = _round_up(min(block_m, _round_up(b, 8)), 8)  # sublane-aligned M tile
    b_pad = _round_up(b, bm)
    if b_pad != b:
        h = jnp.pad(h, ((0, b_pad - b), (0, 0)))      # zero rows: harmless, sliced away

    kernel = functools.partial(_downstream_kernel, t=t, r=r)
    out = pl.pallas_call(
        kernel,
        out_shape=jax.ShapeDtypeStruct((b_pad, n_pad), out_dtype),
        grid=(b_pad // bm,),
        in_specs=[
            pl.BlockSpec((bm, k_pad), lambda i: (i, 0)),      # h: tiled over M
            pl.BlockSpec((k_pad, n_pad), lambda i: (0, 0)),   # w: resident across grid
        ],
        out_specs=pl.BlockSpec((bm, n_pad), lambda i: (i, 0)),
        compiler_params=pltpu.CompilerParams(
            dimension_semantics=("parallel",)),               # v7x: shard M over both TCs
    )(h, w_fused)

    out = out[:b].astype(jnp.float32)
    return out[:, :t], out[:, t:t + r]


def downstream_forward(hidden_state, w_fused, d, t, r):
    """Module-equivalent forward: hidden_state.view(1,-1) -> (predictions, attention)."""
    h = hidden_state.reshape(1, -1)
    return downstream_forward_batched(h, w_fused, d, t, r, block_m=8)


def xavier_normal(key, shape):
    fan_in, fan_out = shape
    std = (2.0 / (fan_in + fan_out)) ** 0.5
    return std * jax.random.normal(key, shape, dtype=jnp.float32)


if __name__ == "__main__":
    # Module config (mirrors args.combined_dimensions=64); small synthetic sizes.
    combined_dimensions = 64
    target_number = 2            # e.g. binary node labels
    num_identifiers = 10         # len(identifiers)

    key = jax.random.PRNGKey(0)
    k_h, k_c, k_r, k_b = jax.random.split(key, 4)

    # LSTM hidden state; view(1, -1) flattens it to (1, combined_dimensions).
    hidden_state = jax.random.normal(k_h, (8, 8), dtype=jnp.float32)  # 64 elements

    theta_classification = xavier_normal(k_c, (combined_dimensions, target_number))
    theta_rank = xavier_normal(k_r, (combined_dimensions, num_identifiers))

    w_fused, d, t, r = fuse_params(theta_classification, theta_rank)

    # ---- Module-equivalent path (M = 1), parity against an f32 HIGHEST-precision reference.
    predictions, attention = downstream_forward(hidden_state, w_fused, d, t, r)
    jax.block_until_ready((predictions, attention))

    h_ref = hidden_state.reshape(1, -1)
    hp = jax.lax.Precision.HIGHEST
    ref_pred = jnp.dot(h_ref, theta_classification, precision=hp)
    ref_att = jax.nn.softmax(jnp.dot(h_ref, theta_rank, precision=hp), axis=1)

    assert predictions.shape == (1, target_number)
    assert attention.shape == (1, num_identifiers)
    assert jnp.allclose(predictions, ref_pred, atol=2e-2, rtol=2e-2)
    assert jnp.allclose(attention, ref_att, atol=5e-3, rtol=5e-3)
    assert jnp.allclose(jnp.sum(attention, axis=1), 1.0, atol=1e-5)

    # ---- Batched path (grid over M tiles, weight resident, parallel semantics).
    batch = 64
    hs_batch = jax.random.normal(k_b, (batch, combined_dimensions), dtype=jnp.float32)
    pred_b, att_b = downstream_forward_batched(hs_batch, w_fused, d, t, r, block_m=32)
    jax.block_until_ready((pred_b, att_b))

    ref_pred_b = jnp.dot(hs_batch, theta_classification, precision=hp)
    ref_att_b = jax.nn.softmax(jnp.dot(hs_batch, theta_rank, precision=hp), axis=1)
    assert pred_b.shape == (batch, target_number)
    assert att_b.shape == (batch, num_identifiers)
    assert jnp.allclose(pred_b, ref_pred_b, atol=2e-2, rtol=2e-2)
    assert jnp.allclose(att_b, ref_att_b, atol=5e-3, rtol=5e-3)

    print("KERNEL_OK")
</pallas_src>

<mosaic_0001>
module attributes {stable_mosaic.version = 11 : i64} {
  func.func @_downstream_kernel(%arg0: i32, %arg1: memref<8x128xf32, #tpu.memory_space<vmem>>, %arg2: memref<128x128xf32, #tpu.memory_space<vmem>>, %arg3: memref<8x128xf32, #tpu.memory_space<vmem>>) attributes {dimension_semantics = [#tpu.dimension_semantics<parallel>], iteration_bounds = array<i64: 1>, scalar_prefetch = 0 : i64, scratch_operands = 0 : i64, tpu.core_type = #tpu.core_type<tc>, window_params = [{transform_indices = @transform_0, window_bounds = array<i64: 8, 128>}, {pipeline_mode = #tpu.pipeline_mode<synchronous>, transform_indices = @transform_1, window_bounds = array<i64: 128, 128>}, {transform_indices = @transform_2, window_bounds = array<i64: 8, 128>}]} {
    %c0 = arith.constant 0 : index
    %c0_0 = arith.constant 0 : index
    %0 = vector.load %arg1[%c0, %c0_0] : memref<8x128xf32, #tpu.memory_space<vmem>>, vector<8x128xf32>
    %c0_1 = arith.constant 0 : index
    %c0_2 = arith.constant 0 : index
    %1 = vector.load %arg2[%c0_1, %c0_2] : memref<128x128xf32, #tpu.memory_space<vmem>>, vector<128x128xf32>
    %cst = arith.constant dense<0.000000e+00> : vector<8x128xf32>
    %2 = tpu.matmul %0, %1, %cst {dimension_numbers = #tpu.dot_dimension_numbers<[1], [0], [0], [1], [0, 0, 1, 1], [], []>} : vector<8x128xf32>, vector<128x128xf32>, vector<8x128xf32> -> vector<8x128xf32>
    %3 = tpu.iota {dimensions = array<i32: 1>} : vector<8x128xi32>
    %c2_i32 = arith.constant 2 : i32
    %4 = vector.broadcast %c2_i32 : i32 to vector<8x128xi32>
    %5 = arith.cmpi sge, %3, %4 : vector<8x128xi32>
    %c12_i32 = arith.constant 12 : i32
    %6 = vector.broadcast %c12_i32 : i32 to vector<8x128xi32>
    %7 = arith.cmpi slt, %3, %6 : vector<8x128xi32>
    %8 = arith.andi %5, %7 : vector<8x128xi1>
    %cst_3 = arith.constant 0xFF800000 : f32
    %9 = vector.broadcast %cst_3 : f32 to vector<8x128xf32>
    %10 = arith.select %8, %2, %9 : vector<8x128xi1>, vector<8x128xf32>
    %cst_4 = arith.constant dense<0xFF800000> : vector<8xf32>
    %11 = vector.multi_reduction <maximumf>, %10, %cst_4 [1] : vector<8x128xf32> to vector<8xf32>
    %12 = vector.shape_cast %11 : vector<8xf32> to vector<8x1xf32>
    %13 = vector.broadcast %12 : vector<8x1xf32> to vector<8x128xf32>
    %14 = arith.subf %10, %13 : vector<8x128xf32>
    %15 = math.exp %14 : vector<8x128xf32>
    %cst_5 = arith.constant dense<0.000000e+00> : vector<8xf32>
    %16 = vector.multi_reduction <add>, %15, %cst_5 [1] : vector<8x128xf32> to vector<8xf32>
    %17 = vector.shape_cast %16 : vector<8xf32> to vector<8x1xf32>
    %18 = vector.broadcast %17 : vector<8x1xf32> to vector<8x128xf32>
    %19 = arith.divf %15, %18 : vector<8x128xf32>
    %20 = arith.select %8, %19, %2 : vector<8x128xi1>, vector<8x128xf32>
    %c0_6 = arith.constant 0 : index
    %c0_7 = arith.constant 0 : index
    %21 = vector.load %arg3[%c0_6, %c0_7] : memref<8x128xf32, #tpu.memory_space<vmem>>, vector<8x128xf32>
    tpu.vector_store %arg3[%c0_6, %c0_7], %20 {strides = array<i32>} : memref<8x128xf32, #tpu.memory_space<vmem>>, vector<8x128xf32>,
    return
  }
  func.func @transform_0(%arg0: i32) -> (i32, i32) {
    %c0_i32 = arith.constant 0 : i32
    %c0_i32_0 = arith.constant 0 : i32
    return %arg0, %c0_i32 : i32, i32
  }
  func.func @transform_1(%arg0: i32) -> (i32, i32) {
    %c0_i32 = arith.constant 0 : i32
    %c0_i32_0 = arith.constant 0 : i32
    %c0_i32_1 = arith.constant 0 : i32
    return %c0_i32, %c0_i32_0 : i32, i32
  }
  func.func @transform_2(%arg0: i32) -> (i32, i32) {
    %c0_i32 = arith.constant 0 : i32
    %c0_i32_0 = arith.constant 0 : i32
    return %arg0, %c0_i32 : i32, i32
  }
}

</mosaic_0001>

<llo_original>
// kernel: tpu_custom_call.1
$region0: #{tpu_custom_call.1}
  #allocation0 [shape = 'u32[]', space=smem, size = 0x4, offset = 0x4, fixed_abs, tag = 'smem constant byte address 0x4 - core index']
  #allocation1 [shape = 'u32[144,128]{1,0:T(1,128)}', space=vmem, size = 0x12000, scoped, tag = 'internal scratch']
  %s0 = inlined_call_operand.hbm [shape: f32[8,128], index: 0, kind: input, shape index: {}]
  %s1 = inlined_call_operand.hbm [shape: f32[128,128], index: 1, kind: input, shape index: {}]
  %s2 = inlined_call_operand.hbm [shape: f32[8,128], index: 2, kind: output, shape index: {}]
  %s3 = sld [smem:[#allocation0]]
  $region26: #{tpu_custom_call.1} parent=0
    _
  %s5 = ssub.s32 1, %s3
  %s6 = scalar_select 0, %s5, %s3
  $region1: #{tpu_custom_call.1} parent=0
    #allocation2 [shape = 'u8[4096]{0}', space=vmem, size = 0x1000, scoped, tag = 'input window, operand 0, single buffered']
    #allocation3 [shape = 's32[1]{0}', space=sflag, size = 0x4, scoped, tag = 'scoped memory for tpu_custom_call.1']
    #allocation4 [shape = 's32[1]{0}', space=sflag, size = 0x4, scoped, tag = 'scoped memory for tpu_custom_call.1']
    #allocation5 [shape = 'u8[65536]{0}', space=vmem, size = 0x10000, scoped, tag = 'input window, operand 1, single buffered']
    #allocation6 [shape = 's32[1]{0}', space=sflag, size = 0x4, scoped, tag = 'scoped memory for tpu_custom_call.1']
    #allocation7 [shape = 'u8[4096]{0}', space=vmem, size = 0x1000, scoped, tag = 'output window, operand 0, single buffered']
    %7 = vsyncpa [#allocation3], 0
    %8 = vsyncpa [#allocation6], 0
    %9 = vsyncpa [#allocation4], 0
    // Predicated region
    $region2: #{tpu_custom_call.1} parent=1 // pred_check
      _
    $region3: #{tpu_custom_call.1} parent=1 // pred_check_branch
      %11 = sbr.rel (0) target = $region5
    $region4: #{tpu_custom_call.1} parent=1 // pred_region
      %s13 = ssub.s32 128, 128
      %14 = vsyncadd [#allocation3], %s13
      %s16 = sshll.u32 [#allocation2], 4
      %s17 = int_to_ptr.vmem [resolvable:$true] %s16
      %19 = dma.hbm_to_vmem [thread:$0]  %s0, 128, %s17, [#allocation3]
    $region5: #{tpu_custom_call.1} parent=1 // pred_fallthru
      _
    // Predicated region
    $region6: #{tpu_custom_call.1} parent=1 // pred_check
      _
    $region7: #{tpu_custom_call.1} parent=1 // pred_check_branch
      %21 = sbr.rel (0) target = $region9
    $region8: #{tpu_custom_call.1} parent=1 // pred_region
      %s23 = ssub.s32 2048, 2048
      %24 = vsyncadd [#allocation6], %s23
      %s25 = sshll.u32 [#allocation5], 4
      %s26 = int_to_ptr.vmem [resolvable:$true] %s25
      %31 = dma.hbm_to_vmem [thread:$0]  %s1, 2048, %s26, [#allocation6], 128, 128, 8
    $region9: #{tpu_custom_call.1} parent=1 // pred_fallthru
      _
    // Predicated region
    $region10: #{tpu_custom_call.1} parent=1 // pred_check
      _
    $region11: #{tpu_custom_call.1} parent=1 // pred_check_branch
      %33 = sbr.rel (0) target = $region13
    $region12: #{tpu_custom_call.1} parent=1 // pred_region
      %34 = dma.done [#allocation3], 128
    $region13: #{tpu_custom_call.1} parent=1 // pred_fallthru
      _
    // Predicated region
    $region14: #{tpu_custom_call.1} parent=1 // pred_check
      _
    $region15: #{tpu_custom_call.1} parent=1 // pred_check_branch
      %36 = sbr.rel (0) target = $region17
    $region16: #{tpu_custom_call.1} parent=1 // pred_region
      %37 = dma.done [#allocation6], 2048
    $region17: #{tpu_custom_call.1} parent=1 // pred_fallthru
      _
    %v38 = vld [vmem:[#allocation2] sm:$0xff]
    %v39 = vld [vmem:[#allocation5] sm:$0xff]
    %v40 = vld [vmem:[#allocation5 + $0x8] sm:$0xff]
    %v41 = vld [vmem:[#allocation5 + $0x10] sm:$0xff]
    %v42 = vld [vmem:[#allocation5 + $0x18] sm:$0xff]
    %v43 = vld [vmem:[#allocation5 + $0x20] sm:$0xff]
    %v44 = vld [vmem:[#allocation5 + $0x28] sm:$0xff]
    %v45 = vld [vmem:[#allocation5 + $0x30] sm:$0xff]
    %v46 = vld [vmem:[#allocation5 + $0x38] sm:$0xff]
    %v47 = vld [vmem:[#allocation5 + $0x40] sm:$0xff]
    %v48 = vld [vmem:[#allocation5 + $0x48] sm:$0xff]
    %v49 = vld [vmem:[#allocation5 + $0x50] sm:$0xff]
    %v50 = vld [vmem:[#allocation5 + $0x58] sm:$0xff]
    %v51 = vld [vmem:[#allocation5 + $0x60] sm:$0xff]
    %v52 = vld [vmem:[#allocation5 + $0x68] sm:$0xff]
    %v53 = vld [vmem:[#allocation5 + $0x70] sm:$0xff]
    %v54 = vld [vmem:[#allocation5 + $0x78] sm:$0xff]
    %55 = vmatprep.subr.mxu0 0.0
    %56 = vmatpush1.msra.mxu0 %v39
    %57 = vmatprep.subr.mxu0 0.0
    %58 = vmatpush1.msra.mxu0 %v40
    %59 = vmatprep.subr.mxu0 0.0
    %60 = vmatpush1.msra.mxu0 %v41
    %61 = vmatprep.subr.mxu0 0.0
    %62 = vmatpush1.msra.mxu0 %v42
    %63 = vmatprep.subr.mxu0 0.0
    %64 = vmatpush1.msra.mxu0 %v43
    %65 = vmatprep.subr.mxu0 0.0
    %66 = vmatpush1.msra.mxu0 %v44
    %67 = vmatprep.subr.mxu0 0.0
    %68 = vmatpush1.msra.mxu0 %v45
    %69 = vmatprep.subr.mxu0 0.0
    %70 = vmatpush1.msra.mxu0 %v46
    %71 = vmatprep.subr.mxu0 0.0
    %72 = vmatpush1.msra.mxu0 %v47
    %73 = vmatprep.subr.mxu0 0.0
    %74 = vmatpush1.msra.mxu0 %v48
    %75 = vmatprep.subr.mxu0 0.0
    %76 = vmatpush1.msra.mxu0 %v49
    %77 = vmatprep.subr.mxu0 0.0
    %78 = vmatpush1.msra.mxu0 %v50
    %79 = vmatprep.subr.mxu0 0.0
    %80 = vmatpush1.msra.mxu0 %v51
    %81 = vmatprep.subr.mxu0 0.0
    %82 = vmatpush1.msra.mxu0 %v52
    %83 = vmatprep.subr.mxu0 0.0
    %84 = vmatpush1.msra.mxu0 %v53
    %85 = vmatprep.subr.mxu0 0.0
    %86 = vmatpush1.msra.mxu0 %v54
    %87 = vmatprep.subr.mxu0 0.0
    %88 = vmatpush1.msra.mxu0 0.0
    %89 = vmatprep.subr.mxu0 0.0
    %90 = vmatpush1.msra.mxu0 0.0
    %91 = vmatprep.subr.mxu0 0.0
    %92 = vmatpush1.msra.mxu0 0.0
    %93 = vmatprep.subr.mxu0 0.0
    %94 = vmatpush1.msra.mxu0 0.0
    %95 = vmatprep.subr.mxu0 0.0
    %96 = vmatpush1.msra.mxu0 0.0
    %97 = vmatprep.subr.mxu0 0.0
    %98 = vmatpush1.msra.mxu0 0.0
    %99 = vmatprep.subr.mxu0 0.0
    %100 = vmatpush1.msra.mxu0 0.0
    %101 = vmatprep.subr.mxu0 0.0
    %102 = vmatpush1.msra.mxu0 0.0
    %103 = vmatprep.subr.mxu0 0.0
    %104 = vmatpush1.msra.mxu0 0.0
    %105 = vmatprep.subr.mxu0 0.0
    %106 = vmatpush1.msra.mxu0 0.0
    %107 = vmatprep.subr.mxu0 0.0
    %108 = vmatpush1.msra.mxu0 0.0
    %109 = vmatprep.subr.mxu0 0.0
    %110 = vmatpush1.msra.mxu0 0.0
    %111 = vmatprep.subr.mxu0 0.0
    %112 = vmatpush1.msra.mxu0 0.0
    %113 = vmatprep.subr.mxu0 0.0
    %114 = vmatpush1.msra.mxu0 0.0
    %115 = vmatprep.subr.mxu0 0.0
    %116 = vmatpush1.msra.mxu0 0.0
    %117 = vmatprep.subr.mxu0 0.0
    %118 = vmatpush1.msra.mxu0 0.0
    %119 = vmatprep.mubr.f32.mxu0 0.0
    %120 = vmatmul.mubr.f32.gmra.mrb[0].mxu0 %v38
    %v121 = vpop.f32.mrb[0].mxu0
    %v122 = vadd.f32 0.0, %v121
    %v123 = vpop.f32.mrb[0].mxu0
    %124 = vdwg.mxu0
    %v125 = vlaneseq
    %v126 = vand.u32 %v125, 127
    %vm127 = vcmp.ge.s32.totalorder %v126, 2
    %vm128 = vcmp.lt.s32.totalorder %v126, 12
    %vm129 = vmand %vm127, %vm128
    %v130 = vsel %vm129, %v122, -inf
    %131 = vmax.xlane.f32.xlu0 %v130
    %v132 = vpop.xlane.xlu0 %131
    %v133 = vsub.f32 %v130, %v132
    %v134 = vmul.f32 %v133, 1.442695
    %v135 = vpow.pop %v134
    %136 = vadd.xlane.f32.xlu0 %v135
    %v137 = vpop.xlane.xlu0 %136
    %v138 = vrcp.pop %v137
    %v139 = vmul.f32 %v135, %v138
    %v140 = vsel %vm129, %v139, %v122
    %141 = vst [vmem:[#allocation7] sm:$0xff] %v140
    // Predicated region
    $region18: #{tpu_custom_call.1} parent=1 // pred_check
      _
    $region19: #{tpu_custom_call.1} parent=1 // pred_check_branch
      %143 = sbr.rel (0) target = $region21
    $region20: #{tpu_custom_call.1} parent=1 // pred_region
      %s145 = ssub.s32 128, 128
      %146 = vsyncadd [#allocation4], %s145
      %s148 = sshll.u32 [#allocation7], 4
      %s149 = int_to_ptr.vmem [resolvable:$true] %s148
      %151 = dma.vmem_to_hbm [thread:$0]  %s149, 128, %s2, [#allocation4]
    $region21: #{tpu_custom_call.1} parent=1 // pred_fallthru
      _
    // Predicated region
    $region22: #{tpu_custom_call.1} parent=1 // pred_check
      _
    $region23: #{tpu_custom_call.1} parent=1 // pred_check_branch
      %153 = sbr.rel (0) target = $region25
    $region24: #{tpu_custom_call.1} parent=1 // pred_region
      %154 = dma.done [#allocation4], 128
    $region25: #{tpu_custom_call.1} parent=1 // pred_fallthru
      _
    %155 = vsyncpa [#allocation3], 1
    %156 = vsyncpa [#allocation6], 1
    %157 = vsyncpa [#allocation4], 1

</llo_original>
